<compile_context>
chip_gen: v7x
topology: tpu7x:2x2x1
jax: 0.10.0
libtpu: 0.0.40
codegen_flags: <defaults>
</compile_context>

<pallas_src>
import functools

import jax
import jax.numpy as jnp
from jax.experimental import pallas as pl
from jax.experimental.pallas import tpu as pltpu


# ---------------------------------------------------------------------------
# Kernels
# ---------------------------------------------------------------------------
def _pw_kernel(x_ref, w_ref, s_ref, b_ref, o_ref, *, act_silu):
    """1x1 conv (matmul) + folded-BN affine + optional SiLU."""
    y = jnp.dot(x_ref[...], w_ref[...], preferred_element_type=jnp.float32)
    y = y * s_ref[...] + b_ref[...]
    if act_silu:
        y = y * jax.nn.sigmoid(y)
    o_ref[...] = y.astype(o_ref.dtype)


def _pw_res_kernel(x_ref, w_ref, s_ref, b_ref, r_ref, o_ref, *, act_silu):
    """Same as _pw_kernel, plus a residual add fused on the output."""
    y = jnp.dot(x_ref[...], w_ref[...], preferred_element_type=jnp.float32)
    y = y * s_ref[...] + b_ref[...]
    if act_silu:
        y = y * jax.nn.sigmoid(y)
    y = y + r_ref[...]
    o_ref[...] = y.astype(o_ref.dtype)


def _split_pw_kernel(x_ref, w_ref, s_ref, b_ref, skip_ref, proc_ref, *, hidden):
    """split_conv: 1x1 conv + BN + SiLU, channel-chunked into two outputs in-kernel."""
    y = jnp.dot(x_ref[...], w_ref[...], preferred_element_type=jnp.float32)
    y = y * s_ref[...] + b_ref[...]
    y = y * jax.nn.sigmoid(y)
    skip_ref[...] = y[:, :hidden].astype(skip_ref.dtype)
    proc_ref[...] = y[:, hidden:].astype(proc_ref.dtype)


def _ff_kernel(x_ref, w1_ref, s1_ref, b1_ref, w2_ref, s2_ref, b2_ref, o_ref):
    """Fused feed-forward: SiLU(ff1(x)) -> ff2 -> + x (intermediate stays in VMEM)."""
    x = x_ref[...]
    t = jnp.dot(x, w1_ref[...], preferred_element_type=jnp.float32)
    t = t * s1_ref[...] + b1_ref[...]
    t = t * jax.nn.sigmoid(t)
    y = jnp.dot(t, w2_ref[...], preferred_element_type=jnp.float32)
    y = y * s2_ref[...] + b2_ref[...] + x.astype(jnp.float32)
    o_ref[...] = y.astype(o_ref.dtype)


def _merge_pw_kernel(a_ref, b_ref, wa_ref, wb_ref, s_ref, bias_ref, o_ref):
    """Output projection over concat([skip, proc]) without materializing the concat."""
    y = jnp.dot(a_ref[...], wa_ref[...], preferred_element_type=jnp.float32)
    y = y + jnp.dot(b_ref[...], wb_ref[...], preferred_element_type=jnp.float32)
    y = y * s_ref[...] + bias_ref[...]
    y = y * jax.nn.sigmoid(y)
    o_ref[...] = y.astype(o_ref.dtype)


def _attn_kernel(qkv_ref, att_ref, val_ref, *, kd):
    """Per-(batch, head) spatial self-attention.

    q/k/v are contiguous channel slices of the qkv activation block; the
    attention scale is pre-folded into the q channels' BN affine.  Also copies
    out the value slice in the (HW, head_dim) layout the depthwise conv uses.
    """
    blk = qkv_ref[0]                      # (HW, 2*kd + hd)
    q = blk[:, :kd]                       # (HW, kd)  -- already scaled
    k = blk[:, kd:2 * kd]                 # (HW, kd)
    v = blk[:, 2 * kd:]                   # (HW, hd)
    # scores[i, j] = sum_d q[i, d] * k[j, d]
    s = jax.lax.dot_general(
        q, k, dimension_numbers=(((1,), (1,)), ((), ())),
        preferred_element_type=jnp.float32)                 # (HW, HW)
    m = jnp.max(s, axis=-1, keepdims=True)
    p = jnp.exp(s - m)
    denom = jnp.sum(p, axis=-1, keepdims=True)
    w = p * pl.reciprocal(denom, approx=True)
    o = jnp.dot(w, v, preferred_element_type=jnp.float32)   # (HW, hd)
    att_ref[0] = o.astype(att_ref.dtype)
    val_ref[0] = v.astype(val_ref.dtype)
    # TODO(synk): flash-style KV tiling (online softmax over HW blocks) for large HW
    # so the full HWxHW score matrix never lives in VMEM (v7x 64 MiB budget).


def _dw3x3_kernel(xp_ref, w_ref, s_ref, b_ref, r_ref, o_ref, *, H, W):
    """Depthwise 3x3 conv (padding=1) + folded-BN affine + residual add (one batch)."""
    xp = xp_ref[...]   # (1, H+2, W+2, C)
    w = w_ref[...]     # (3, 3, C)
    acc = jnp.zeros(o_ref.shape, jnp.float32)
    for dy in range(3):
        for dx in range(3):
            acc = acc + xp[:, dy:dy + H, dx:dx + W, :] * w[dy, dx, :]
    acc = acc * s_ref[...] + b_ref[...]
    acc = acc + r_ref[...]
    o_ref[...] = acc.astype(o_ref.dtype)


# ---------------------------------------------------------------------------
# Wrappers (pallas_call plumbing)
# ---------------------------------------------------------------------------
_PARALLEL_1D = pltpu.CompilerParams(dimension_semantics=("parallel",))


def _row_tile(M, tm):
    """Pick a row tile; never fall back to tm=M for large M (use cdiv grid)."""
    tm = min(tm, M)
    return tm, pl.cdiv(M, tm)


def pointwise_conv_bn(x, w, scale, bias, *, act_silu, residual=None, tm=256):
    """x: (M, Cin), w: (Cin, Cout) -> (M, Cout)."""
    M, Cin = x.shape
    Cout = w.shape[1]
    tm, n_blk = _row_tile(M, tm)
    s2 = scale.reshape(1, Cout)
    b2 = bias.reshape(1, Cout)

    in_specs = [
        pl.BlockSpec((tm, Cin), lambda i: (i, 0)),
        pl.BlockSpec((Cin, Cout), lambda i: (0, 0)),
        pl.BlockSpec((1, Cout), lambda i: (0, 0)),
        pl.BlockSpec((1, Cout), lambda i: (0, 0)),
    ]
    args = [x, w, s2, b2]
    if residual is not None:
        in_specs.append(pl.BlockSpec((tm, Cout), lambda i: (i, 0)))
        args.append(residual)
        kernel = functools.partial(_pw_res_kernel, act_silu=act_silu)
    else:
        kernel = functools.partial(_pw_kernel, act_silu=act_silu)

    return pl.pallas_call(
        kernel,
        out_shape=jax.ShapeDtypeStruct((M, Cout), x.dtype),
        grid=(n_blk,),
        in_specs=in_specs,
        out_specs=pl.BlockSpec((tm, Cout), lambda i: (i, 0)),
        compiler_params=_PARALLEL_1D,
    )(*args)


def split_conv_bn_silu(x, w, scale, bias, *, hidden, tm=256):
    """split_conv: (M, Cin) -> (skip, proc), each (M, hidden), fused chunk."""
    M, Cin = x.shape
    Cout = w.shape[1]  # 2*hidden
    tm, n_blk = _row_tile(M, tm)
    return pl.pallas_call(
        functools.partial(_split_pw_kernel, hidden=hidden),
        out_shape=(jax.ShapeDtypeStruct((M, hidden), x.dtype),
                   jax.ShapeDtypeStruct((M, hidden), x.dtype)),
        grid=(n_blk,),
        in_specs=[
            pl.BlockSpec((tm, Cin), lambda i: (i, 0)),
            pl.BlockSpec((Cin, Cout), lambda i: (0, 0)),
            pl.BlockSpec((1, Cout), lambda i: (0, 0)),
            pl.BlockSpec((1, Cout), lambda i: (0, 0)),
        ],
        out_specs=(pl.BlockSpec((tm, hidden), lambda i: (i, 0)),
                   pl.BlockSpec((tm, hidden), lambda i: (i, 0))),
        compiler_params=_PARALLEL_1D,
    )(x, w, scale.reshape(1, Cout), bias.reshape(1, Cout))


def feed_forward_fused(x, ff1, ff2, *, tm=256):
    """x + ff2(SiLU(ff1(x))), with the (M, 2*hidden) intermediate kept in VMEM."""
    w1, s1, b1 = ff1
    w2, s2, b2 = ff2
    M, hidden = x.shape
    mid = w1.shape[1]
    tm, n_blk = _row_tile(M, tm)
    return pl.pallas_call(
        _ff_kernel,
        out_shape=jax.ShapeDtypeStruct((M, hidden), x.dtype),
        grid=(n_blk,),
        in_specs=[
            pl.BlockSpec((tm, hidden), lambda i: (i, 0)),
            pl.BlockSpec((hidden, mid), lambda i: (0, 0)),
            pl.BlockSpec((1, mid), lambda i: (0, 0)),
            pl.BlockSpec((1, mid), lambda i: (0, 0)),
            pl.BlockSpec((mid, hidden), lambda i: (0, 0)),
            pl.BlockSpec((1, hidden), lambda i: (0, 0)),
            pl.BlockSpec((1, hidden), lambda i: (0, 0)),
        ],
        out_specs=pl.BlockSpec((tm, hidden), lambda i: (i, 0)),
        compiler_params=_PARALLEL_1D,
    )(x, w1, s1.reshape(1, mid), b1.reshape(1, mid),
      w2, s2.reshape(1, hidden), b2.reshape(1, hidden))


def merge_proj(skip, proc, proj, *, tm=256):
    """output_projection(concat([skip, proc])) without materializing the concat."""
    w, scale, bias = proj
    M, hidden = skip.shape
    Cout = w.shape[1]
    w_skip, w_proc = w[:hidden], w[hidden:]
    tm, n_blk = _row_tile(M, tm)
    return pl.pallas_call(
        _merge_pw_kernel,
        out_shape=jax.ShapeDtypeStruct((M, Cout), skip.dtype),
        grid=(n_blk,),
        in_specs=[
            pl.BlockSpec((tm, hidden), lambda i: (i, 0)),
            pl.BlockSpec((tm, hidden), lambda i: (i, 0)),
            pl.BlockSpec((hidden, Cout), lambda i: (0, 0)),
            pl.BlockSpec((hidden, Cout), lambda i: (0, 0)),
            pl.BlockSpec((1, Cout), lambda i: (0, 0)),
            pl.BlockSpec((1, Cout), lambda i: (0, 0)),
        ],
        out_specs=pl.BlockSpec((tm, Cout), lambda i: (i, 0)),
        compiler_params=_PARALLEL_1D,
    )(skip, proc, w_skip, w_proc, scale.reshape(1, Cout), bias.reshape(1, Cout))


def mha_spatial(qkv3, *, nh, kd, hd):
    """qkv3: (B, HW, nh*(2*kd+hd)) with per-head [q, k, v] channel layout.

    Returns (attended, value), each (B, HW, nh*hd), head-major channels —
    exactly the layout the depthwise conv / output projection consume.
    """
    B, HW, _ = qkv3.shape
    per_head = 2 * kd + hd
    return pl.pallas_call(
        functools.partial(_attn_kernel, kd=kd),
        out_shape=(jax.ShapeDtypeStruct((B, HW, nh * hd), qkv3.dtype),
                   jax.ShapeDtypeStruct((B, HW, nh * hd), qkv3.dtype)),
        grid=(B, nh),
        in_specs=[pl.BlockSpec((1, HW, per_head), lambda b, h: (b, 0, h))],
        out_specs=(pl.BlockSpec((1, HW, hd), lambda b, h: (b, 0, h)),
                   pl.BlockSpec((1, HW, hd), lambda b, h: (b, 0, h))),
        compiler_params=pltpu.CompilerParams(
            dimension_semantics=("parallel", "parallel")),
    )(qkv3)


def depthwise3x3_bn(x_nhwc, w, scale, bias, *, residual):
    """x_nhwc: (B, H, W, C), w: (3, 3, C) -> (B, H, W, C); adds `residual`.

    Batch-tiled grid (parallel) so only one image's working set lives in VMEM.
    """
    B, H, W, C = x_nhwc.shape
    xp = jnp.pad(x_nhwc, ((0, 0), (1, 1), (1, 1), (0, 0)))
    # TODO(synk): move the zero-padding in-kernel (masked shifts / halo DMA with
    # row tiling) to remove this extra padded HBM activation for large H*W*C.
    s4 = scale.reshape(1, 1, 1, C)
    b4 = bias.reshape(1, 1, 1, C)
    return pl.pallas_call(
        functools.partial(_dw3x3_kernel, H=H, W=W),
        out_shape=jax.ShapeDtypeStruct((B, H, W, C), x_nhwc.dtype),
        grid=(B,),
        in_specs=[
            pl.BlockSpec((1, H + 2, W + 2, C), lambda b: (b, 0, 0, 0)),
            pl.BlockSpec((3, 3, C), lambda b: (0, 0, 0)),
            pl.BlockSpec((1, 1, 1, C), lambda b: (0, 0, 0, 0)),
            pl.BlockSpec((1, 1, 1, C), lambda b: (0, 0, 0, 0)),
            pl.BlockSpec((1, H, W, C), lambda b: (b, 0, 0, 0)),
        ],
        out_specs=pl.BlockSpec((1, H, W, C), lambda b: (b, 0, 0, 0)),
        compiler_params=_PARALLEL_1D,
    )(xp, w, s4, b4, residual)


# ---------------------------------------------------------------------------
# Parameters (deterministic, BN folded into per-channel scale/bias)
# ---------------------------------------------------------------------------
def _fold_bn(gamma, beta, mean, var, eps=1e-5):
    scale = gamma / jnp.sqrt(var + eps)
    bias = beta - mean * scale
    return scale, bias


def _conv_bn_params(key, cin, cout):
    kw, kg, kb, km, kv = jax.random.split(key, 5)
    w = jax.random.normal(kw, (cin, cout), jnp.float32) / jnp.sqrt(float(cin))
    gamma = 1.0 + 0.1 * jax.random.normal(kg, (cout,), jnp.float32)
    beta = 0.1 * jax.random.normal(kb, (cout,), jnp.float32)
    mean = 0.1 * jax.random.normal(km, (cout,), jnp.float32)
    var = jnp.abs(1.0 + 0.1 * jax.random.normal(kv, (cout,), jnp.float32))
    s, b = _fold_bn(gamma, beta, mean, var)
    return (w, s, b)


def _dwconv_bn_params(key, ch):
    kw, kg, kb, km, kv = jax.random.split(key, 5)
    w = jax.random.normal(kw, (3, 3, ch), jnp.float32) / 3.0
    gamma = 1.0 + 0.1 * jax.random.normal(kg, (ch,), jnp.float32)
    beta = 0.1 * jax.random.normal(kb, (ch,), jnp.float32)
    mean = 0.1 * jax.random.normal(km, (ch,), jnp.float32)
    var = jnp.abs(1.0 + 0.1 * jax.random.normal(kv, (ch,), jnp.float32))
    s, b = _fold_bn(gamma, beta, mean, var)
    return (w, s, b)


def make_params(key, in_channels, *, expansion_ratio=0.5, min_heads=64):
    hidden = int(in_channels * expansion_ratio)
    num_heads = max(1, hidden // min_heads)
    head_dim = hidden // num_heads
    key_dim = int(head_dim * 0.5)
    qkv_ch = hidden + 2 * key_dim * num_heads
    attn_scale = key_dim ** (-0.5)

    ks = jax.random.split(key, 7)
    qkv = _conv_bn_params(ks[1], hidden, qkv_ch)

    # Fold the attention scale into the q channels of the qkv conv's BN affine so
    # the attention kernel never scales the (HW, HW) score matrix.
    per_head = 2 * key_dim + head_dim
    mult = jnp.tile(
        jnp.concatenate([jnp.full((key_dim,), attn_scale, jnp.float32),
                         jnp.ones((key_dim + head_dim,), jnp.float32)]),
        num_heads)
    qkv_scaled = (qkv[0], qkv[1] * mult, qkv[2] * mult)

    return {
        "hidden": hidden,
        "num_heads": num_heads,
        "head_dim": head_dim,
        "key_dim": key_dim,
        "attn_scale": attn_scale,
        "split": _conv_bn_params(ks[0], in_channels, 2 * hidden),
        "qkv": qkv,                # unscaled (used by the pure-JAX reference)
        "qkv_scaled": qkv_scaled,  # scale folded into q channels (Pallas path)
        "pe": _dwconv_bn_params(ks[2], hidden),
        "attn_out": _conv_bn_params(ks[3], hidden, hidden),
        "ff1": _conv_bn_params(ks[4], hidden, 2 * hidden),
        "ff2": _conv_bn_params(ks[5], 2 * hidden, hidden),
        "proj": _conv_bn_params(ks[6], 2 * hidden, in_channels),
    }


# ---------------------------------------------------------------------------
# PSA forward pass (Pallas kernels on the hot path)
# ---------------------------------------------------------------------------
def psa_forward(x_nchw, p):
    B, C, H, W = x_nchw.shape
    hidden = p["hidden"]
    nh, kd, hd = p["num_heads"], p["key_dim"], p["head_dim"]
    HW = H * W
    M = B * HW

    # NCHW -> (B*HW, C) row-major over spatial positions (glue)
    x = jnp.transpose(x_nchw, (0, 2, 3, 1)).reshape(M, C)

    # split_conv: 1x1 conv + BN + SiLU, channel chunk fused into the kernel
    skip, proc = split_conv_bn_silu(x, *p["split"], hidden=hidden)     # 2x (M, hidden)

    # ----- Attention(proc) -----
    # qkv conv (attention scale already folded into q channels' BN affine)
    qkv = pointwise_conv_bn(proc, *p["qkv_scaled"], act_silu=False)    # (M, qkv_ch)
    qkv3 = qkv.reshape(B, HW, nh * (2 * kd + hd))                      # free reshape

    # per-(batch, head) attention; also emits value in (B, HW, hidden) layout
    attended, value = mha_spatial(qkv3, nh=nh, kd=kd, hd=hd)
    attended_sp = attended.reshape(B, H, W, hidden)                    # free reshape
    value_sp = value.reshape(B, H, W, hidden)                          # free reshape

    # positional_encoder(value) + attended  (fused residual in dw kernel)
    enhanced = depthwise3x3_bn(value_sp, *p["pe"], residual=attended_sp)
    enhanced = enhanced.reshape(M, hidden)

    # attention output projection, fused with outer residual: proc + attention(proc)
    proc = pointwise_conv_bn(enhanced, *p["attn_out"], act_silu=False, residual=proc)

    # ----- feed-forward with residual (ff1 + ff2 fused, intermediate in VMEM) -----
    proc = feed_forward_fused(proc, p["ff1"], p["ff2"])

    # merge + output projection (concat fused into the kernel)
    out = merge_proj(skip, proc, p["proj"])                            # (M, C)
    return jnp.transpose(out.reshape(B, H, W, C), (0, 3, 1, 2))        # back to NCHW


# ---------------------------------------------------------------------------
# Pure-JAX reference (for numerical verification only)
# ---------------------------------------------------------------------------
def _pw_ref(x, w, s, b, act):
    y = (x @ w) * s + b
    return y * jax.nn.sigmoid(y) if act else y


def _dw_ref(x, w, s, b):
    B, H, W, C = x.shape
    xp = jnp.pad(x, ((0, 0), (1, 1), (1, 1), (0, 0)))
    acc = jnp.zeros_like(x)
    for dy in range(3):
        for dx in range(3):
            acc = acc + xp[:, dy:dy + H, dx:dx + W, :] * w[dy, dx, :]
    return acc * s + b


def psa_reference(x_nchw, p):
    B, C, H, W = x_nchw.shape
    hidden, nh, kd, hd = p["hidden"], p["num_heads"], p["key_dim"], p["head_dim"]
    HW = H * W
    x = jnp.transpose(x_nchw, (0, 2, 3, 1)).reshape(B * HW, C)

    feats = _pw_ref(x, *p["split"], True)
    skip, proc = feats[:, :hidden], feats[:, hidden:]

    qkv = _pw_ref(proc, *p["qkv"], False).reshape(B, HW, nh, 2 * kd + hd)
    q = jnp.transpose(qkv[..., :kd], (0, 2, 1, 3))
    k = jnp.transpose(qkv[..., kd:2 * kd], (0, 2, 1, 3))
    v = jnp.transpose(qkv[..., 2 * kd:], (0, 2, 1, 3))

    scores = jnp.einsum("bnik,bnjk->bnij", q, k) * p["attn_scale"]
    wts = jax.nn.softmax(scores, axis=-1)
    att = jnp.einsum("bnij,bnjd->bnid", wts, v)
    att_sp = jnp.transpose(att, (0, 2, 1, 3)).reshape(B, H, W, hidden)
    val_sp = jnp.transpose(v, (0, 2, 1, 3)).reshape(B, H, W, hidden)

    enhanced = (_dw_ref(val_sp, *p["pe"]) + att_sp).reshape(B * HW, hidden)
    proc = proc + _pw_ref(enhanced, *p["attn_out"], False)
    proc = proc + _pw_ref(_pw_ref(proc, *p["ff1"], True), *p["ff2"], False)

    out = _pw_ref(jnp.concatenate([skip, proc], axis=-1), *p["proj"], True)
    return jnp.transpose(out.reshape(B, H, W, C), (0, 3, 1, 2))


# ---------------------------------------------------------------------------
if __name__ == "__main__":
    key = jax.random.PRNGKey(0)
    kx, kp = jax.random.split(key)

    B, C, H, W = 2, 8, 16, 16          # in_channels == out_channels == 8, hidden == 4
    x = jax.random.normal(kx, (B, C, H, W), jnp.float32)
    params = make_params(kp, C)

    out = psa_forward(x, params)
    out = jax.block_until_ready(out)

    ref = psa_reference(x, params)
    err = float(jnp.max(jnp.abs(out - ref)))
    assert out.shape == (B, C, H, W), out.shape
    # approx reciprocal in the softmax -> slightly looser tolerance than exact divide
    assert err < 5e-3, f"max abs error vs reference: {err}"

    print("KERNEL_OK")
</pallas_src>

<mosaic_0001>
module attributes {stable_mosaic.version = 11 : i64} {
  func.func @_split_pw_kernel(%arg0: i32, %arg1: memref<256x8xf32, #tpu.memory_space<vmem>>, %arg2: memref<8x8xf32, #tpu.memory_space<vmem>>, %arg3: memref<1x8xf32, #tpu.memory_space<vmem>>, %arg4: memref<1x8xf32, #tpu.memory_space<vmem>>, %arg5: memref<256x4xf32, #tpu.memory_space<vmem>>, %arg6: memref<256x4xf32, #tpu.memory_space<vmem>>) attributes {dimension_semantics = [#tpu.dimension_semantics<parallel>], iteration_bounds = array<i64: 2>, scalar_prefetch = 0 : i64, scratch_operands = 0 : i64, tpu.core_type = #tpu.core_type<tc>, window_params = [{transform_indices = @transform_0, window_bounds = array<i64: 256, 8>}, {pipeline_mode = #tpu.pipeline_mode<synchronous>, transform_indices = @transform_1, window_bounds = array<i64: 8, 8>}, {pipeline_mode = #tpu.pipeline_mode<synchronous>, transform_indices = @transform_2, window_bounds = array<i64: 1, 8>}, {pipeline_mode = #tpu.pipeline_mode<synchronous>, transform_indices = @transform_3, window_bounds = array<i64: 1, 8>}, {transform_indices = @transform_4, window_bounds = array<i64: 256, 4>}, {transform_indices = @transform_5, window_bounds = array<i64: 256, 4>}]} {
    %c0 = arith.constant 0 : index
    %c0_0 = arith.constant 0 : index
    %0 = vector.load %arg1[%c0, %c0_0] : memref<256x8xf32, #tpu.memory_space<vmem>>, vector<256x8xf32>
    %c0_1 = arith.constant 0 : index
    %c0_2 = arith.constant 0 : index
    %1 = vector.load %arg2[%c0_1, %c0_2] : memref<8x8xf32, #tpu.memory_space<vmem>>, vector<8x8xf32>
    %cst = arith.constant dense<0.000000e+00> : vector<256x8xf32>
    %2 = tpu.matmul %0, %1, %cst {dimension_numbers = #tpu.dot_dimension_numbers<[1], [0], [0], [1], [0, 0, 1, 1], [], []>} : vector<256x8xf32>, vector<8x8xf32>, vector<256x8xf32> -> vector<256x8xf32>
    %c0_3 = arith.constant 0 : index
    %c0_4 = arith.constant 0 : index
    %3 = vector.load %arg3[%c0_3, %c0_4] : memref<1x8xf32, #tpu.memory_space<vmem>>, vector<1x8xf32>
    %4 = vector.broadcast %3 : vector<1x8xf32> to vector<256x8xf32>
    %5 = arith.mulf %2, %4 : vector<256x8xf32>
    %c0_5 = arith.constant 0 : index
    %c0_6 = arith.constant 0 : index
    %6 = vector.load %arg4[%c0_5, %c0_6] : memref<1x8xf32, #tpu.memory_space<vmem>>, vector<1x8xf32>
    %7 = vector.broadcast %6 : vector<1x8xf32> to vector<256x8xf32>
    %8 = arith.addf %5, %7 : vector<256x8xf32>
    %9 = arith.negf %8 : vector<256x8xf32>
    %10 = math.exp %9 : vector<256x8xf32>
    %cst_7 = arith.constant 1.000000e+00 : f32
    %11 = vector.broadcast %cst_7 : f32 to vector<256x8xf32>
    %12 = arith.addf %11, %10 : vector<256x8xf32>
    %13 = arith.divf %11, %12 : vector<256x8xf32>
    %14 = arith.mulf %8, %13 : vector<256x8xf32>
    %15 = vector.extract_strided_slice %14 {offsets = [0, 0], sizes = [256, 4], strides = [1, 1]} : vector<256x8xf32> to vector<256x4xf32>
    %c0_8 = arith.constant 0 : index
    %c0_9 = arith.constant 0 : index
    %16 = vector.load %arg5[%c0_8, %c0_9] : memref<256x4xf32, #tpu.memory_space<vmem>>, vector<256x4xf32>
    tpu.vector_store %arg5[%c0_8, %c0_9], %15 {strides = array<i32>} : memref<256x4xf32, #tpu.memory_space<vmem>>, vector<256x4xf32>,
    %17 = vector.extract_strided_slice %14 {offsets = [0, 4], sizes = [256, 4], strides = [1, 1]} : vector<256x8xf32> to vector<256x4xf32>
    %c0_10 = arith.constant 0 : index
    %c0_11 = arith.constant 0 : index
    %18 = vector.load %arg6[%c0_10, %c0_11] : memref<256x4xf32, #tpu.memory_space<vmem>>, vector<256x4xf32>
    tpu.vector_store %arg6[%c0_10, %c0_11], %17 {strides = array<i32>} : memref<256x4xf32, #tpu.memory_space<vmem>>, vector<256x4xf32>,
    return
  }
  func.func @transform_0(%arg0: i32) -> (i32, i32) {
    %c0_i32 = arith.constant 0 : i32
    %c0_i32_0 = arith.constant 0 : i32
    return %arg0, %c0_i32 : i32, i32
  }
  func.func @transform_1(%arg0: i32) -> (i32, i32) {
    %c0_i32 = arith.constant 0 : i32
    %c0_i32_0 = arith.constant 0 : i32
    %c0_i32_1 = arith.constant 0 : i32
    return %c0_i32, %c0_i32_0 : i32, i32
  }
  func.func @transform_2(%arg0: i32) -> (i32, i32) {
    %c0_i32 = arith.constant 0 : i32
    %c0_i32_0 = arith.constant 0 : i32
    %c0_i32_1 = arith.constant 0 : i32
    return %c0_i32, %c0_i32_0 : i32, i32
  }
  func.func @transform_3(%arg0: i32) -> (i32, i32) {
    %c0_i32 = arith.constant 0 : i32
    %c0_i32_0 = arith.constant 0 : i32
    %c0_i32_1 = arith.constant 0 : i32
    return %c0_i32, %c0_i32_0 : i32, i32
  }
  func.func @transform_4(%arg0: i32) -> (i32, i32) {
    %c0_i32 = arith.constant 0 : i32
    %c0_i32_0 = arith.constant 0 : i32
    return %arg0, %c0_i32 : i32, i32
  }
  func.func @transform_5(%arg0: i32) -> (i32, i32) {
    %c0_i32 = arith.constant 0 : i32
    %c0_i32_0 = arith.constant 0 : i32
    return %arg0, %c0_i32 : i32, i32
  }
}

</mosaic_0001>

<llo_original>
// kernel: tpu_custom_call.1
$region0: #{tpu_custom_call.1}
  #allocation0 [shape = 'u32[]', space=smem, size = 0x4, offset = 0x4, fixed_abs, tag = 'smem constant byte address 0x4 - core index']
  #allocation1 [shape = 'u32[144,128]{1,0:T(1,128)}', space=vmem, size = 0x12000, scoped, tag = 'internal scratch']
  %s0 = inlined_call_operand.vmem [shape: f32[512,8], index: 0, kind: input, shape index: {}]
  %s1 = inlined_call_operand.vmem [shape: f32[8,8], index: 1, kind: input, shape index: {}]
  %s2 = inlined_call_operand.vmem [shape: f32[1,8], index: 2, kind: input, shape index: {}]
  %s3 = inlined_call_operand.vmem [shape: f32[1,8], index: 3, kind: input, shape index: {}]
  %s4 = inlined_call_operand.vmem [shape: f32[512,4], index: 4, kind: output, shape index: {0}]
  %s5 = inlined_call_operand.vmem [shape: f32[512,4], index: 5, kind: output, shape index: {1}]
  %6 = xla_tuple %s4, %s5
  %s7 = sld [smem:[#allocation0]]
  $region57: #{tpu_custom_call.1} parent=0
    _
  %s9 = ssub.s32 1, %s7
  %s10 = scalar_select 0, %s9, %s7
  loop: start=0, step=1, limit=4
  $region2: #{tpu_custom_call.1} parent=0 // loop_pre_header
    _
  $region3: #{tpu_custom_call.1} parent=0 // loop_header
    %s12 = sphi 0, %s16
    %p13 = scmp.ge.s32.totalorder %s12, 4
    %s22 = sphi 0, %s24
    %s25 = sphi 0, %s22
    %s26 = sphi 0, %s25
    %s42 = sphi 0, %s26
    %s46 = sphi 0, %s46
    %s48 = sphi 0, %s46
    %s49 = sphi 0, %s48
    %s63 = sphi 0, %s49
    %s67 = sphi 0, %s67
    %s69 = sphi 0, %s67
    %s70 = sphi 0, %s69
    %s84 = sphi 0, %s70
    %s88 = sphi 0, %s88
    %s90 = sphi 0, %s88
    %s91 = sphi 0, %s90
    %s105 = sphi 0, %s91
    %s111 = sphi 0, %s113
    %s114 = sphi 0, %s111
    %s115 = sphi 0, %s114
    %s131 = sphi 0, %s115
    %s137 = sphi 0, %s139
    %s140 = sphi 0, %s137
    %s141 = sphi 0, %s140
    %s157 = sphi 0, %s141
  $region4: #{tpu_custom_call.1} parent=0 // loop_header_branch
    %15 = sbr.rel (%p13) target = $region8
  $region5: #{tpu_custom_call.1} parent=0 // loop_body
    %s17 = ssub.s32 %s12, 1
    %s18 = ssub.s32 %s12, 2
    %s19 = sadd.s32 %s12, 1
    %s20 = ssub.s32 %s12, %s19
    %p21 = scmp.eq.s32.totalorder %s20, 0
    %s23 = sadd.s32 %s22, 1
    %s24 = scalar_select %p21, %s22, %s23
    %p27 = pneg %p21
    %p28 = scmp.eq.s32.totalorder %s12, 1
    %p29 = por %p27, %p28
    %p30 = scmp.ne.s32.totalorder %s22, %s25
    %p31 = scmp.eq.s32.totalorder %s12, 0
    %p32 = por %p30, %p31
    %p33 = scmp.ne.s32.totalorder %s22, %s25
    %p34 = scmp.eq.s32.totalorder %s17, 1
    %p35 = por %p33, %p34
    %p36 = scmp.ne.s32.totalorder %s25, %s26
    %p37 = scmp.eq.s32.totalorder %s17, 0
    %p38 = por %p36, %p37
    %p39 = scmp.ne.s32.totalorder %s25, %s26
    %p40 = scmp.eq.s32.totalorder %s18, 1
    %p41 = por %p39, %p40
    %p43 = scmp.ne.s32.totalorder %s26, %s42
    %p44 = scmp.eq.s32.totalorder %s18, 0
    %p45 = por %p43, %p44
    %s47 = sadd.s32 %s46, 1
    %p50 = scmp.eq.s32.totalorder %s12, 1
    %p51 = scmp.ne.s32.totalorder %s46, %s48
    %p52 = scmp.eq.s32.totalorder %s12, 0
    %p53 = por %p51, %p52
    %p54 = scmp.ne.s32.totalorder %s46, %s48
    %p55 = scmp.eq.s32.totalorder %s17, 1
    %p56 = por %p54, %p55
    %p57 = scmp.ne.s32.totalorder %s48, %s49
    %p58 = scmp.eq.s32.totalorder %s17, 0
    %p59 = por %p57, %p58
    %p60 = scmp.ne.s32.totalorder %s48, %s49
    %p61 = scmp.eq.s32.totalorder %s18, 1
    %p62 = por %p60, %p61
    %p64 = scmp.ne.s32.totalorder %s49, %s63
    %p65 = scmp.eq.s32.totalorder %s18, 0
    %p66 = por %p64, %p65
    %s68 = sadd.s32 %s67, 1
    %p71 = scmp.eq.s32.totalorder %s12, 1
    %p72 = scmp.ne.s32.totalorder %s67, %s69
    %p73 = scmp.eq.s32.totalorder %s12, 0
    %p74 = por %p72, %p73
    %p75 = scmp.ne.s32.totalorder %s67, %s69
    %p76 = scmp.eq.s32.totalorder %s17, 1
    %p77 = por %p75, %p76
    %p78 = scmp.ne.s32.totalorder %s69, %s70
    %p79 = scmp.eq.s32.totalorder %s17, 0
    %p80 = por %p78, %p79
    %p81 = scmp.ne.s32.totalorder %s69, %s70
    %p82 = scmp.eq.s32.totalorder %s18, 1
    %p83 = por %p81, %p82
    %p85 = scmp.ne.s32.totalorder %s70, %s84
    %p86 = scmp.eq.s32.totalorder %s18, 0
    %p87 = por %p85, %p86
    %s89 = sadd.s32 %s88, 1
    %p92 = scmp.eq.s32.totalorder %s12, 1
    %p93 = scmp.ne.s32.totalorder %s88, %s90
    %p94 = scmp.eq.s32.totalorder %s12, 0
    %p95 = por %p93, %p94
    %p96 = scmp.ne.s32.totalorder %s88, %s90
    %p97 = scmp.eq.s32.totalorder %s17, 1
    %p98 = por %p96, %p97
    %p99 = scmp.ne.s32.totalorder %s90, %s91
    %p100 = scmp.eq.s32.totalorder %s17, 0
    %p101 = por %p99, %p100
    %p102 = scmp.ne.s32.totalorder %s90, %s91
    %p103 = scmp.eq.s32.totalorder %s18, 1
    %p104 = por %p102, %p103
    %p106 = scmp.ne.s32.totalorder %s91, %s105
    %p107 = scmp.eq.s32.totalorder %s18, 0
    %p108 = por %p106, %p107
    %s109 = ssub.s32 %s12, %s19
    %p110 = scmp.eq.s32.totalorder %s109, 0
    %s112 = sadd.s32 %s111, 1
    %s113 = scalar_select %p110, %s111, %s112
    %p116 = pneg %p110
    %p117 = scmp.eq.s32.totalorder %s12, 1
    %p118 = por %p116, %p117
    %p119 = scmp.ne.s32.totalorder %s111, %s114
    %p120 = scmp.eq.s32.totalorder %s12, 0
    %p121 = por %p119, %p120
    %p122 = scmp.ne.s32.totalorder %s111, %s114
    %p123 = scmp.eq.s32.totalorder %s17, 1
    %p124 = por %p122, %p123
    %p125 = scmp.ne.s32.totalorder %s114, %s115
    %p126 = scmp.eq.s32.totalorder %s17, 0
    %p127 = por %p125, %p126
    %p128 = scmp.ne.s32.totalorder %s114, %s115
    %p129 = scmp.eq.s32.totalorder %s18, 1
    %p130 = por %p128, %p129
    %p132 = scmp.ne.s32.totalorder %s115, %s131
    %p133 = scmp.eq.s32.totalorder %s18, 0
    %p134 = por %p132, %p133
    %s135 = ssub.s32 %s12, %s19
    %p136 = scmp.eq.s32.totalorder %s135, 0
    %s138 = sadd.s32 %s137, 1
    %s139 = scalar_select %p136, %s137, %s138
    %p142 = pneg %p136
    %p143 = scmp.eq.s32.totalorder %s12, 1
    %p144 = por %p142, %p143
    %p145 = scmp.ne.s32.totalorder %s137, %s140
    %p146 = scmp.eq.s32.totalorder %s12, 0
    %p147 = por %p145, %p146
    %p148 = scmp.ne.s32.totalorder %s137, %s140
    %p149 = scmp.eq.s32.totalorder %s17, 1
    %p150 = por %p148, %p149
    %p151 = scmp.ne.s32.totalorder %s140, %s141
    %p152 = scmp.eq.s32.totalorder %s17, 0
    %p153 = por %p151, %p152
    %p154 = scmp.ne.s32.totalorder %s140, %s141
    %p155 = scmp.eq.s32.totalorder %s18, 1
    %p156 = por %p154, %p155
    %p158 = scmp.ne.s32.totalorder %s141, %s157
    %p159 = scmp.eq.s32.totalorder %s18, 0
    %p160 = por %p158, %p159
    %p161 = scmp.le.s32.totalorder 1, %s12
    %p162 = scmp.lt.s32.totalorder %s12, 3
    %p163 = pnand %p161, %p162
    %p164 = pneg %p163
    // Predicated region
    $region9: #{tpu_custom_call.1} parent=5 // pred_check
      _
    $region10: #{tpu_custom_call.1} parent=5 // pred_check_branch
      %166 = sbr.rel (%p163) target = $region12
    $region11: #{tpu_custom_call.1} parent=5 // pred_region
      %s167 = ssub.s32 %s12, 1
      // Predicated region
      $region13: #{tpu_custom_call.1} parent=11 // pred_check
        %p168 = pneg %p59
      $region14: #{tpu_custom_call.1} parent=11 // pred_check_branch
        %170 = sbr.rel (%p168) target = $region16
      $region15: #{tpu_custom_call.1} parent=11 // pred_region
        _
      $region16: #{tpu_custom_call.1} parent=11 // pred_fallthru
        _
      // Predicated region
      $region17: #{tpu_custom_call.1} parent=11 // pred_check
        %p171 = pneg %p80
      $region18: #{tpu_custom_call.1} parent=11 // pred_check_branch
        %173 = sbr.rel (%p171) target = $region20
      $region19: #{tpu_custom_call.1} parent=11 // pred_region
        _
      $region20: #{tpu_custom_call.1} parent=11 // pred_fallthru
        _
      // Predicated region
      $region21: #{tpu_custom_call.1} parent=11 // pred_check
        %p174 = pneg %p101
      $region22: #{tpu_custom_call.1} parent=11 // pred_check_branch
        %176 = sbr.rel (%p174) target = $region24
      $region23: #{tpu_custom_call.1} parent=11 // pred_region
        _
      $region24: #{tpu_custom_call.1} parent=11 // pred_fallthru
        _
    $region12: #{tpu_custom_call.1} parent=5 // pred_fallthru
      _
    %p177 = scmp.lt.s32.totalorder %s12, 2
    // Predicated region
    $region25: #{tpu_custom_call.1} parent=5 // pred_check
      %p178 = pneg %p177
    $region26: #{tpu_custom_call.1} parent=5 // pred_check_branch
      %180 = sbr.rel (%p178) target = $region28
    $region27: #{tpu_custom_call.1} parent=5 // pred_region
      // Predicated region
      $region29: #{tpu_custom_call.1} parent=27 // pred_check
        %p181 = pneg %p32
      $region30: #{tpu_custom_call.1} parent=27 // pred_check_branch
        %183 = sbr.rel (%p181) target = $region32
      $region31: #{tpu_custom_call.1} parent=27 // pred_region
        %s184 = smul.u32 32, %s12
        %p185 = scmp.lt.s32.totalorder %s184, 63
        %s186 = scalar_select %p185, %s184, 63
        %s187 = smul.addr %s186, 8
        %s188 = scalar_lea.vmem %s0, %s187
        %s189 = smul.u32 32, %s12
      $region32: #{tpu_custom_call.1} parent=27 // pred_fallthru
        _
    $region28: #{tpu_custom_call.1} parent=5 // pred_fallthru
      _
    %p190 = scmp.le.s32.totalorder 1, %s12
    %p191 = scmp.lt.s32.totalorder %s12, 3
    %p192 = pnand %p190, %p191
    %p193 = pneg %p192
    // Predicated region
    $region33: #{tpu_custom_call.1} parent=5 // pred_check
      _
    $region34: #{tpu_custom_call.1} parent=5 // pred_check_branch
      %195 = sbr.rel (%p192) target = $region36
    $region35: #{tpu_custom_call.1} parent=5 // pred_region
      %s196 = ssub.s32 %s12, 1
      %s197 = smul.u32 32, %s17
      %p198 = scmp.lt.s32.totalorder %s197, 63
      %s199 = scalar_select %p198, %s197, 63
      %s200 = smul.addr %s199, 8
      %s201 = scalar_lea.vmem %s0, %s200
      %p202 = pneg %p38
      %p203 = pneg %p35
      %p204 = pneg %p59
      %p205 = pneg %p56
      %p206 = pneg %p80
      %p207 = pneg %p77
      %p208 = pneg %p101
      %p209 = pneg %p98
      %p210 = pneg %p127
      %p211 = pneg %p124
      %s212 = smul.u32 32, %s17
      %p213 = scmp.lt.s32.totalorder %s212, 63
      %s214 = scalar_select %p213, %s212, 63
      %s215 = smul.addr %s214, 8
      %s216 = scalar_lea.vmem %s4, %s215
      %p217 = pneg %p153
      %p218 = pneg %p150
      %s219 = smul.u32 32, %s17
      %p220 = scmp.lt.s32.totalorder %s219, 63
      %s221 = scalar_select %p220, %s219, 63
      %s222 = smul.addr %s221, 8
      %s223 = scalar_lea.vmem %s5, %s222
      %s224 = smul.u32 32, %s17
      %p225 = scmp.lt.s32.totalorder %s224, 63
      %s226 = scalar_select %p225, %s224, 63
      %s227 = smul.addr %s226, 8
      %s228 = scalar_lea.vmem %s0, %s227
      %s229 = smul.u32 32, %s17
      %s230 = smul.u32 32, %s17
      %p231 = scmp.lt.s32.totalorder %s230, 63
      %s232 = scalar_select %p231, %s230, 63
      %s233 = smul.addr %s232, 8
      %s234 = scalar_lea.vmem %s4, %s233
      %s235 = smul.u32 32, %s17
      %s236 = smul.u32 32, %s17
      %p237 = scmp.lt.s32.totalorder %s236, 63
      %s238 = scalar_select %p237, %s236, 63
      %s239 = smul.addr %s238, 8
      %s240 = scalar_lea.vmem %s5, %s239
      %s241 = smul.u32 32, %s17
      %v242 = vld [vmem:[%s228] sm:$0xff]
      %v243 = vld [vmem:[%s228 + $0x8] sm:$0xff]
      %v244 = vld [vmem:[%s228 + $0x10] sm:$0xff]
      %v245 = vld [vmem:[%s228 + $0x18] sm:$0xff]
      %v246 = vld [vmem:[%s228 + $0x20] sm:$0xff]
      %v247 = vld [vmem:[%s228 + $0x28] sm:$0xff]
      %v248 = vld [vmem:[%s228 + $0x30] sm:$0xff]
      %v249 = vld [vmem:[%s228 + $0x38] sm:$0xff]
      %v250 = vld [vmem:[%s228 + $0x40] sm:$0xff]
      %v251 = vld [vmem:[%s228 + $0x48] sm:$0xff]
      %v252 = vld [vmem:[%s228 + $0x50] sm:$0xff]
      %v253 = vld [vmem:[%s228 + $0x58] sm:$0xff]
      %v254 = vld [vmem:[%s228 + $0x60] sm:$0xff]
      %v255 = vld [vmem:[%s228 + $0x68] sm:$0xff]
      %v256 = vld [vmem:[%s228 + $0x70] sm:$0xff]
      %v257 = vld [vmem:[%s228 + $0x78] sm:$0xff]
      %v258 = vld [vmem:[%s228 + $0x80] sm:$0xff]
      %v259 = vld [vmem:[%s228 + $0x88] sm:$0xff]
      %v260 = vld [vmem:[%s228 + $0x90] sm:$0xff]
      %v261 = vld [vmem:[%s228 + $0x98] sm:$0xff]
      %v262 = vld [vmem:[%s228 + $0xa0] sm:$0xff]
      %v263 = vld [vmem:[%s228 + $0xa8] sm:$0xff]
      %v264 = vld [vmem:[%s228 + $0xb0] sm:$0xff]
      %v265 = vld [vmem:[%s228 + $0xb8] sm:$0xff]
      %v266 = vld [vmem:[%s228 + $0xc0] sm:$0xff]
      %v267 = vld [vmem:[%s228 + $0xc8] sm:$0xff]
      %v268 = vld [vmem:[%s228 + $0xd0] sm:$0xff]
      %v269 = vld [vmem:[%s228 + $0xd8] sm:$0xff]
      %v270 = vld [vmem:[%s228 + $0xe0] sm:$0xff]
      %v271 = vld [vmem:[%s228 + $0xe8] sm:$0xff]
      %v272 = vld [vmem:[%s228 + $0xf0] sm:$0xff]
      %v273 = vld [vmem:[%s228 + $0xf8] sm:$0xff]
      %v274 = vld [vmem:[%s1] sm:$0xff]
      %vm275 = vcmask 64512
      %v277 = vsel %vm275, %v242, 0
      %v280 = vsel %vm275, %v243, 0
      %v283 = vsel %vm275, %v244, 0
      %v286 = vsel %vm275, %v245, 0
      %v289 = vsel %vm275, %v246, 0
      %v292 = vsel %vm275, %v247, 0
      %v295 = vsel %vm275, %v248, 0
      %v298 = vsel %vm275, %v249, 0
      %v301 = vsel %vm275, %v250, 0
      %v304 = vsel %vm275, %v251, 0
      %v307 = vsel %vm275, %v252, 0
      %v310 = vsel %vm275, %v253, 0
      %v313 = vsel %vm275, %v254, 0
      %v316 = vsel %vm275, %v255, 0
      %v319 = vsel %vm275, %v256, 0
      %v322 = vsel %vm275, %v257, 0
      %v325 = vsel %vm275, %v258, 0
      %v328 = vsel %vm275, %v259, 0
      %v331 = vsel %vm275, %v260, 0
      %v334 = vsel %vm275, %v261, 0
      %v337 = vsel %vm275, %v262, 0
      %v340 = vsel %vm275, %v263, 0
      %v343 = vsel %vm275, %v264, 0
      %v346 = vsel %vm275, %v265, 0
      %v349 = vsel %vm275, %v266, 0
      %v352 = vsel %vm275, %v267, 0
      %v355 = vsel %vm275, %v268, 0
      %v358 = vsel %vm275, %v269, 0
      %v361 = vsel %vm275, %v270, 0
      %v364 = vsel %vm275, %v271, 0
      %v367 = vsel %vm275, %v272, 0
      %v370 = vsel %vm275, %v273, 0
      %372 = vmatprep.subr.mxu0 0.0
      %373 = vmatpush1.msra.mxu0 %v274
      %374 = vmatprep.subr.mxu0 0.0
      %375 = vmatpush1.msra.mxu0 0.0
      %376 = vmatprep.subr.mxu0 0.0
      %377 = vmatpush1.msra.mxu0 0.0
      %378 = vmatprep.subr.mxu0 0.0
      %379 = vmatpush1.msra.mxu0 0.0
      %380 = vmatprep.subr.mxu0 0.0
      %381 = vmatpush1.msra.mxu0 0.0
      %382 = vmatprep.subr.mxu0 0.0
      %383 = vmatpush1.msra.mxu0 0.0
      %384 = vmatprep.subr.mxu0 0.0
      %385 = vmatpush1.msra.mxu0 0.0
      %386 = vmatprep.subr.mxu0 0.0
      %387 = vmatpush1.msra.mxu0 0.0
      %388 = vmatprep.subr.mxu0 0.0
      %389 = vmatpush1.msra.mxu0 0.0
      %390 = vmatprep.subr.mxu0 0.0
      %391 = vmatpush1.msra.mxu0 0.0
      %392 = vmatprep.subr.mxu0 0.0
      %393 = vmatpush1.msra.mxu0 0.0
      %394 = vmatprep.subr.mxu0 0.0
      %395 = vmatpush1.msra.mxu0 0.0
      %396 = vmatprep.subr.mxu0 0.0
      %397 = vmatpush1.msra.mxu0 0.0
      %398 = vmatprep.subr.mxu0 0.0
      %399 = vmatpush1.msra.mxu0 0.0
      %400 = vmatprep.subr.mxu0 0.0
      %401 = vmatpush1.msra.mxu0 0.0
      %402 = vmatprep.subr.mxu0 0.0
      %403 = vmatpush1.msra.mxu0 0.0
      %404 = vmatprep.subr.mxu0 0.0
      %405 = vmatpush1.msra.mxu0 0.0
      %406 = vmatprep.subr.mxu0 0.0
      %407 = vmatpush1.msra.mxu0 0.0
      %408 = vmatprep.subr.mxu0 0.0
      %409 = vmatpush1.msra.mxu0 0.0
      %410 = vmatprep.subr.mxu0 0.0
      %411 = vmatpush1.msra.mxu0 0.0
      %412 = vmatprep.subr.mxu0 0.0
      %413 = vmatpush1.msra.mxu0 0.0
      %414 = vmatprep.subr.mxu0 0.0
      %415 = vmatpush1.msra.mxu0 0.0
      %416 = vmatprep.subr.mxu0 0.0
      %417 = vmatpush1.msra.mxu0 0.0
      %418 = vmatprep.subr.mxu0 0.0
      %419 = vmatpush1.msra.mxu0 0.0
      %420 = vmatprep.subr.mxu0 0.0
      %421 = vmatpush1.msra.mxu0 0.0
      %422 = vmatprep.subr.mxu0 0.0
      %423 = vmatpush1.msra.mxu0 0.0
      %424 = vmatprep.subr.mxu0 0.0
      %425 = vmatpush1.msra.mxu0 0.0
      %426 = vmatprep.subr.mxu0 0.0
      %427 = vmatpush1.msra.mxu0 0.0
      %428 = vmatprep.subr.mxu0 0.0
      %429 = vmatpush1.msra.mxu0 0.0
      %430 = vmatprep.subr.mxu0 0.0
      %431 = vmatpush1.msra.mxu0 0.0
      %432 = vmatprep.subr.mxu0 0.0
      %433 = vmatpush1.msra.mxu0 0.0
      %434 = vmatprep.subr.mxu0 0.0
      %435 = vmatpush1.msra.mxu0 0.0
      %436 = vmatprep.mubr.f32.mxu0 0.0
      %437 = vmatmul.mubr.f32.gmra.mrb[0].mxu0 %v277
      %v438 = vpop.f32.mrb[0].mxu0
      %v439 = vadd.f32 0.0, %v438
      %v440 = vpop.f32.mrb[0].mxu0
      %441 = vmatprep.mubr.f32.mxu0 0.0
      %442 = vmatmul.mubr.f32.gmra.mrb[0].mxu0 %v280
      %v443 = vpop.f32.mrb[0].mxu0
      %v444 = vadd.f32 0.0, %v443
      %v445 = vpop.f32.mrb[0].mxu0
      %446 = vmatprep.mubr.f32.mxu0 0.0
      %447 = vmatmul.mubr.f32.gmra.mrb[0].mxu0 %v283
      %v448 = vpop.f32.mrb[0].mxu0
      %v449 = vadd.f32 0.0, %v448
      %v450 = vpop.f32.mrb[0].mxu0
      %451 = vmatprep.mubr.f32.mxu0 0.0
      %452 = vmatmul.mubr.f32.gmra.mrb[0].mxu0 %v286
      %v453 = vpop.f32.mrb[0].mxu0
      %v454 = vadd.f32 0.0, %v453
      %v455 = vpop.f32.mrb[0].mxu0
      %456 = vmatprep.mubr.f32.mxu0 0.0
      %457 = vmatmul.mubr.f32.gmra.mrb[0].mxu0 %v289
      %v458 = vpop.f32.mrb[0].mxu0
      %v459 = vadd.f32 0.0, %v458
      %v460 = vpop.f32.mrb[0].mxu0
      %461 = vmatprep.mubr.f32.mxu0 0.0
      %462 = vmatmul.mubr.f32.gmra.mrb[0].mxu0 %v292
      %v463 = vpop.f32.mrb[0].mxu0
      %v464 = vadd.f32 0.0, %v463
      %v465 = vpop.f32.mrb[0].mxu0
      %466 = vmatprep.mubr.f32.mxu0 0.0
      %467 = vmatmul.mubr.f32.gmra.mrb[0].mxu0 %v295
      %v468 = vpop.f32.mrb[0].mxu0
      %v469 = vadd.f32 0.0, %v468
      %v470 = vpop.f32.mrb[0].mxu0
      %471 = vmatprep.mubr.f32.mxu0 0.0
      %472 = vmatmul.mubr.f32.gmra.mrb[0].mxu0 %v298
      %v473 = vpop.f32.mrb[0].mxu0
      %v474 = vadd.f32 0.0, %v473
      %v475 = vpop.f32.mrb[0].mxu0
      %476 = vmatprep.mubr.f32.mxu0 0.0
      %477 = vmatmul.mubr.f32.gmra.mrb[0].mxu0 %v301
      %v478 = vpop.f32.mrb[0].mxu0
      %v479 = vadd.f32 0.0, %v478
      %v480 = vpop.f32.mrb[0].mxu0
      %481 = vmatprep.mubr.f32.mxu0 0.0
      %482 = vmatmul.mubr.f32.gmra.mrb[0].mxu0 %v304
      %v483 = vpop.f32.mrb[0].mxu0
      %v484 = vadd.f32 0.0, %v483
      %v485 = vpop.f32.mrb[0].mxu0
      %486 = vmatprep.mubr.f32.mxu0 0.0
      %487 = vmatmul.mubr.f32.gmra.mrb[0].mxu0 %v307
      %v488 = vpop.f32.mrb[0].mxu0
      %v489 = vadd.f32 0.0, %v488
      %v490 = vpop.f32.mrb[0].mxu0
      %491 = vmatprep.mubr.f32.mxu0 0.0
      %492 = vmatmul.mubr.f32.gmra.mrb[0].mxu0 %v310
      %v493 = vpop.f32.mrb[0].mxu0
      %v494 = vadd.f32 0.0, %v493
      %v495 = vpop.f32.mrb[0].mxu0
      %496 = vmatprep.mubr.f32.mxu0 0.0
      %497 = vmatmul.mubr.f32.gmra.mrb[0].mxu0 %v313
      %v498 = vpop.f32.mrb[0].mxu0
      %v499 = vadd.f32 0.0, %v498
      %v500 = vpop.f32.mrb[0].mxu0
      %501 = vmatprep.mubr.f32.mxu0 0.0
      %502 = vmatmul.mubr.f32.gmra.mrb[0].mxu0 %v316
      %v503 = vpop.f32.mrb[0].mxu0
      %v504 = vadd.f32 0.0, %v503
      %v505 = vpop.f32.mrb[0].mxu0
      %506 = vmatprep.mubr.f32.mxu0 0.0
      %507 = vmatmul.mubr.f32.gmra.mrb[0].mxu0 %v319
      %v508 = vpop.f32.mrb[0].mxu0
      %v509 = vadd.f32 0.0, %v508
      %v510 = vpop.f32.mrb[0].mxu0
      %511 = vmatprep.mubr.f32.mxu0 0.0
      %512 = vmatmul.mubr.f32.gmra.mrb[0].mxu0 %v322
      %v513 = vpop.f32.mrb[0].mxu0
      %v514 = vadd.f32 0.0, %v513
      %v515 = vpop.f32.mrb[0].mxu0
      %516 = vmatprep.mubr.f32.mxu0 0.0
      %517 = vmatmul.mubr.f32.gmra.mrb[0].mxu0 %v325
      %v518 = vpop.f32.mrb[0].mxu0
      %v519 = vadd.f32 0.0, %v518
      %v520 = vpop.f32.mrb[0].mxu0
      %521 = vmatprep.mubr.f32.mxu0 0.0
      %522 = vmatmul.mubr.f32.gmra.mrb[0].mxu0 %v328
      %v523 = vpop.f32.mrb[0].mxu0
      %v524 = vadd.f32 0.0, %v523
      %v525 = vpop.f32.mrb[0].mxu0
      %526 = vmatprep.mubr.f32.mxu0 0.0
      %527 = vmatmul.mubr.f32.gmra.mrb[0].mxu0 %v331
      %v528 = vpop.f32.mrb[0].mxu0
      %v529 = vadd.f32 0.0, %v528
      %v530 = vpop.f32.mrb[0].mxu0
      %531 = vmatprep.mubr.f32.mxu0 0.0
      %532 = vmatmul.mubr.f32.gmra.mrb[0].mxu0 %v334
      %v533 = vpop.f32.mrb[0].mxu0
      %v534 = vadd.f32 0.0, %v533
      %v535 = vpop.f32.mrb[0].mxu0
      %536 = vmatprep.mubr.f32.mxu0 0.0
      %537 = vmatmul.mubr.f32.gmra.mrb[0].mxu0 %v337
      %v538 = vpop.f32.mrb[0].mxu0
      %v539 = vadd.f32 0.0, %v538
      %v540 = vpop.f32.mrb[0].mxu0
      %541 = vmatprep.mubr.f32.mxu0 0.0
      %542 = vmatmul.mubr.f32.gmra.mrb[0].mxu0 %v340
      %v543 = vpop.f32.mrb[0].mxu0
      %v544 = vadd.f32 0.0, %v543
      %v545 = vpop.f32.mrb[0].mxu0
      %546 = vmatprep.mubr.f32.mxu0 0.0
      %547 = vmatmul.mubr.f32.gmra.mrb[0].mxu0 %v343
      %v548 = vpop.f32.mrb[0].mxu0
      %v549 = vadd.f32 0.0, %v548
      %v550 = vpop.f32.mrb[0].mxu0
      %551 = vmatprep.mubr.f32.mxu0 0.0
      %552 = vmatmul.mubr.f32.gmra.mrb[0].mxu0 %v346
      %v553 = vpop.f32.mrb[0].mxu0
      %v554 = vadd.f32 0.0, %v553
      %v555 = vpop.f32.mrb[0].mxu0
      %556 = vmatprep.mubr.f32.mxu0 0.0
      %557 = vmatmul.mubr.f32.gmra.mrb[0].mxu0 %v349
      %v558 = vpop.f32.mrb[0].mxu0
      %v559 = vadd.f32 0.0, %v558
      %v560 = vpop.f32.mrb[0].mxu0
      %561 = vmatprep.mubr.f32.mxu0 0.0
      %562 = vmatmul.mubr.f32.gmra.mrb[0].mxu0 %v352
      %v563 = vpop.f32.mrb[0].mxu0
      %v564 = vadd.f32 0.0, %v563
      %v565 = vpop.f32.mrb[0].mxu0
      %566 = vmatprep.mubr.f32.mxu0 0.0
      %567 = vmatmul.mubr.f32.gmra.mrb[0].mxu0 %v355
      %v568 = vpop.f32.mrb[0].mxu0
      %v569 = vadd.f32 0.0, %v568
      %v570 = vpop.f32.mrb[0].mxu0
      %571 = vmatprep.mubr.f32.mxu0 0.0
      %572 = vmatmul.mubr.f32.gmra.mrb[0].mxu0 %v358
      %v573 = vpop.f32.mrb[0].mxu0
      %v574 = vadd.f32 0.0, %v573
      %v575 = vpop.f32.mrb[0].mxu0
      %576 = vmatprep.mubr.f32.mxu0 0.0
      %577 = vmatmul.mubr.f32.gmra.mrb[0].mxu0 %v361
      %v578 = vpop.f32.mrb[0].mxu0
      %v579 = vadd.f32 0.0, %v578
      %v580 = vpop.f32.mrb[0].mxu0
      %581 = vmatprep.mubr.f32.mxu0 0.0
      %582 = vmatmul.mubr.f32.gmra.mrb[0].mxu0 %v364
      %v583 = vpop.f32.mrb[0].mxu0
      %v584 = vadd.f32 0.0, %v583
      %v585 = vpop.f32.mrb[0].mxu0
      %586 = vmatprep.mubr.f32.mxu0 0.0
      %587 = vmatmul.mubr.f32.gmra.mrb[0].mxu0 %v367
      %v588 = vpop.f32.mrb[0].mxu0
      %v589 = vadd.f32 0.0, %v588
      %v590 = vpop.f32.mrb[0].mxu0
      %591 = vmatprep.mubr.f32.mxu0 0.0
      %592 = vmatmul.mubr.f32.gmra.mrb[0].mxu0 %v370
      %v593 = vpop.f32.mrb[0].mxu0
      %v594 = vadd.f32 0.0, %v593
      %v595 = vpop.f32.mrb[0].mxu0
      %596 = vdwg.mxu0
      %v597 = vld [vmem:[%s2] sm:$0x1]
      %v599 = vlaneseq
      %v600 = vshrl.u32 %v599, 7
      %v601 = vsub.s32 0, %v600
      %v602 = vrot.slane %v597, %v601
      %v604 = vmul.f32 %v439, %v602
      %v605 = vmul.f32 %v444, %v602
      %v606 = vmul.f32 %v449, %v602
      %v607 = vmul.f32 %v454, %v602
      %v608 = vmul.f32 %v459, %v602
      %v609 = vmul.f32 %v464, %v602
      %v610 = vmul.f32 %v469, %v602
      %v611 = vmul.f32 %v474, %v602
      %v612 = vmul.f32 %v479, %v602
      %v613 = vmul.f32 %v484, %v602
      %v614 = vmul.f32 %v489, %v602
      %v615 = vmul.f32 %v494, %v602
      %v616 = vmul.f32 %v499, %v602
      %v617 = vmul.f32 %v504, %v602
      %v618 = vmul.f32 %v509, %v602
      %v619 = vmul.f32 %v514, %v602
      %v620 = vmul.f32 %v519, %v602
      %v621 = vmul.f32 %v524, %v602
      %v622 = vmul.f32 %v529, %v602
      %v623 = vmul.f32 %v534, %v602
      %v624 = vmul.f32 %v539, %v602
      %v625 = vmul.f32 %v544, %v602
      %v626 = vmul.f32 %v549, %v602
      %v627 = vmul.f32 %v554, %v602
      %v628 = vmul.f32 %v559, %v602
      %v629 = vmul.f32 %v564, %v602
      %v630 = vmul.f32 %v569, %v602
      %v631 = vmul.f32 %v574, %v602
      %v632 = vmul.f32 %v579, %v602
      %v633 = vmul.f32 %v584, %v602
      %v634 = vmul.f32 %v589, %v602
      %v635 = vmul.f32 %v594, %v602
      %v636 = vld [vmem:[%s3] sm:$0x1]
      %v638 = vlaneseq
      %v639 = vshrl.u32 %v638, 7
      %v640 = vsub.s32 0, %v639
      %v641 = vrot.slane %v636, %v640
      %v643 = vadd.f32 %v604, %v641
      %v644 = vadd.f32 %v605, %v641
      %v645 = vadd.f32 %v606, %v641
      %v646 = vadd.f32 %v607, %v641
      %v647 = vadd.f32 %v608, %v641
      %v648 = vadd.f32 %v609, %v641
      %v649 = vadd.f32 %v610, %v641
      %v650 = vadd.f32 %v611, %v641
      %v651 = vadd.f32 %v612, %v641
      %v652 = vadd.f32 %v613, %v641
      %v653 = vadd.f32 %v614, %v641
      %v654 = vadd.f32 %v615, %v641
      %v655 = vadd.f32 %v616, %v641
      %v656 = vadd.f32 %v617, %v641
      %v657 = vadd.f32 %v618, %v641
      %v658 = vadd.f32 %v619, %v641
      %v659 = vadd.f32 %v620, %v641
      %v660 = vadd.f32 %v621, %v641
      %v661 = vadd.f32 %v622, %v641
      %v662 = vadd.f32 %v623, %v641
      %v663 = vadd.f32 %v624, %v641
      %v664 = vadd.f32 %v625, %v641
      %v665 = vadd.f32 %v626, %v641
      %v666 = vadd.f32 %v627, %v641
      %v667 = vadd.f32 %v628, %v641
      %v668 = vadd.f32 %v629, %v641
      %v669 = vadd.f32 %v630, %v641
      %v670 = vadd.f32 %v631, %v641
      %v671 = vadd.f32 %v632, %v641
      %v672 = vadd.f32 %v633, %v641
      %v673 = vadd.f32 %v634, %v641
      %v674 = vadd.f32 %v635, %v641
      %v675 = vxor.u32 %v643, 2147483648
      %v676 = vxor.u32 %v644, 2147483648
      %v677 = vxor.u32 %v645, 2147483648
      %v678 = vxor.u32 %v646, 2147483648
      %v679 = vxor.u32 %v647, 2147483648
      %v680 = vxor.u32 %v648, 2147483648
      %v681 = vxor.u32 %v649, 2147483648
      %v682 = vxor.u32 %v650, 2147483648
      %v683 = vxor.u32 %v651, 2147483648
      %v684 = vxor.u32 %v652, 2147483648
      %v685 = vxor.u32 %v653, 2147483648
      %v686 = vxor.u32 %v654, 2147483648
      %v687 = vxor.u32 %v655, 2147483648
      %v688 = vxor.u32 %v656, 2147483648
      %v689 = vxor.u32 %v657, 2147483648
      %v690 = vxor.u32 %v658, 2147483648
      %v691 = vxor.u32 %v659, 2147483648
      %v692 = vxor.u32 %v660, 2147483648
      %v693 = vxor.u32 %v661, 2147483648
      %v694 = vxor.u32 %v662, 2147483648
      %v695 = vxor.u32 %v663, 2147483648
      %v696 = vxor.u32 %v664, 2147483648
      %v697 = vxor.u32 %v665, 2147483648
      %v698 = vxor.u32 %v666, 2147483648
      %v699 = vxor.u32 %v667, 2147483648
      %v700 = vxor.u32 %v668, 2147483648
      %v701 = vxor.u32 %v669, 2147483648
      %v702 = vxor.u32 %v670, 2147483648
      %v703 = vxor.u32 %v671, 2147483648
      %v704 = vxor.u32 %v672, 2147483648
      %v705 = vxor.u32 %v673, 2147483648
      %v706 = vxor.u32 %v674, 2147483648
      %v707 = vmul.f32 %v675, 1.442695
      %v708 = vpow.pop %v707
      %v709 = vmul.f32 %v676, 1.442695
      %v710 = vpow.pop %v709
      %v711 = vmul.f32 %v677, 1.442695
      %v712 = vpow.pop %v711
      %v713 = vmul.f32 %v678, 1.442695
      %v714 = vpow.pop %v713
      %v715 = vmul.f32 %v679, 1.442695
      %v716 = vpow.pop %v715
      %v717 = vmul.f32 %v680, 1.442695
      %v718 = vpow.pop %v717
      %v719 = vmul.f32 %v681, 1.442695
      %v720 = vpow.pop %v719
      %v721 = vmul.f32 %v682, 1.442695
      %v722 = vpow.pop %v721
      %v723 = vmul.f32 %v683, 1.442695
      %v724 = vpow.pop %v723
      %v725 = vmul.f32 %v684, 1.442695
      %v726 = vpow.pop %v725
      %v727 = vmul.f32 %v685, 1.442695
      %v728 = vpow.pop %v727
      %v729 = vmul.f32 %v686, 1.442695
      %v730 = vpow.pop %v729
      %v731 = vmul.f32 %v687, 1.442695
      %v732 = vpow.pop %v731
      %v733 = vmul.f32 %v688, 1.442695
      %v734 = vpow.pop %v733
      %v735 = vmul.f32 %v689, 1.442695
      %v736 = vpow.pop %v735
      %v737 = vmul.f32 %v690, 1.442695
      %v738 = vpow.pop %v737
      %v739 = vmul.f32 %v691, 1.442695
      %v740 = vpow.pop %v739
      %v741 = vmul.f32 %v692, 1.442695
      %v742 = vpow.pop %v741
      %v743 = vmul.f32 %v693, 1.442695
      %v744 = vpow.pop %v743
      %v745 = vmul.f32 %v694, 1.442695
      %v746 = vpow.pop %v745
      %v747 = vmul.f32 %v695, 1.442695
      %v748 = vpow.pop %v747
      %v749 = vmul.f32 %v696, 1.442695
      %v750 = vpow.pop %v749
      %v751 = vmul.f32 %v697, 1.442695
      %v752 = vpow.pop %v751
      %v753 = vmul.f32 %v698, 1.442695
      %v754 = vpow.pop %v753
      %v755 = vmul.f32 %v699, 1.442695
      %v756 = vpow.pop %v755
      %v757 = vmul.f32 %v700, 1.442695
      %v758 = vpow.pop %v757
      %v759 = vmul.f32 %v701, 1.442695
      %v760 = vpow.pop %v759
      %v761 = vmul.f32 %v702, 1.442695
      %v762 = vpow.pop %v761
      %v763 = vmul.f32 %v703, 1.442695
      %v764 = vpow.pop %v763
      %v765 = vmul.f32 %v704, 1.442695
      %v766 = vpow.pop %v765
      %v767 = vmul.f32 %v705, 1.442695
      %v768 = vpow.pop %v767
      %v769 = vmul.f32 %v706, 1.442695
      %v770 = vpow.pop %v769
      %v771 = vadd.f32 %v708, 1.0
      %v772 = vadd.f32 %v710, 1.0
      %v773 = vadd.f32 %v712, 1.0
      %v774 = vadd.f32 %v714, 1.0
      %v775 = vadd.f32 %v716, 1.0
      %v776 = vadd.f32 %v718, 1.0
      %v777 = vadd.f32 %v720, 1.0
      %v778 = vadd.f32 %v722, 1.0
      %v779 = vadd.f32 %v724, 1.0
      %v780 = vadd.f32 %v726, 1.0
      %v781 = vadd.f32 %v728, 1.0
      %v782 = vadd.f32 %v730, 1.0
      %v783 = vadd.f32 %v732, 1.0
      %v784 = vadd.f32 %v734, 1.0
      %v785 = vadd.f32 %v736, 1.0
      %v786 = vadd.f32 %v738, 1.0
      %v787 = vadd.f32 %v740, 1.0
      %v788 = vadd.f32 %v742, 1.0
      %v789 = vadd.f32 %v744, 1.0
      %v790 = vadd.f32 %v746, 1.0
      %v791 = vadd.f32 %v748, 1.0
      %v792 = vadd.f32 %v750, 1.0
      %v793 = vadd.f32 %v752, 1.0
      %v794 = vadd.f32 %v754, 1.0
      %v795 = vadd.f32 %v756, 1.0
      %v796 = vadd.f32 %v758, 1.0
      %v797 = vadd.f32 %v760, 1.0
      %v798 = vadd.f32 %v762, 1.0
      %v799 = vadd.f32 %v764, 1.0
      %v800 = vadd.f32 %v766, 1.0
      %v801 = vadd.f32 %v768, 1.0
      %v802 = vadd.f32 %v770, 1.0
      %v803 = vrcp.pop %v771
      %v804 = vmul.f32 1.0, %v803
      %v805 = vrcp.pop %v772
      %v806 = vmul.f32 1.0, %v805
      %v807 = vrcp.pop %v773
      %v808 = vmul.f32 1.0, %v807
      %v809 = vrcp.pop %v774
      %v810 = vmul.f32 1.0, %v809
      %v811 = vrcp.pop %v775
      %v812 = vmul.f32 1.0, %v811
      %v813 = vrcp.pop %v776
      %v814 = vmul.f32 1.0, %v813
      %v815 = vrcp.pop %v777
      %v816 = vmul.f32 1.0, %v815
      %v817 = vrcp.pop %v778
      %v818 = vmul.f32 1.0, %v817
      %v819 = vrcp.pop %v779
      %v820 = vmul.f32 1.0, %v819
      %v821 = vrcp.pop %v780
      %v822 = vmul.f32 1.0, %v821
      %v823 = vrcp.pop %v781
      %v824 = vmul.f32 1.0, %v823
      %v825 = vrcp.pop %v782
      %v826 = vmul.f32 1.0, %v825
      %v827 = vrcp.pop %v783
      %v828 = vmul.f32 1.0, %v827
      %v829 = vrcp.pop %v784
      %v830 = vmul.f32 1.0, %v829
      %v831 = vrcp.pop %v785
      %v832 = vmul.f32 1.0, %v831
      %v833 = vrcp.pop %v786
      %v834 = vmul.f32 1.0, %v833
      %v835 = vrcp.pop %v787
      %v836 = vmul.f32 1.0, %v835
      %v837 = vrcp.pop %v788
      %v838 = vmul.f32 1.0, %v837
      %v839 = vrcp.pop %v789
      %v840 = vmul.f32 1.0, %v839
      %v841 = vrcp.pop %v790
      %v842 = vmul.f32 1.0, %v841
      %v843 = vrcp.pop %v791
      %v844 = vmul.f32 1.0, %v843
      %v845 = vrcp.pop %v792
      %v846 = vmul.f32 1.0, %v845
      %v847 = vrcp.pop %v793
      %v848 = vmul.f32 1.0, %v847
      %v849 = vrcp.pop %v794
      %v850 = vmul.f32 1.0, %v849
      %v851 = vrcp.pop %v795
      %v852 = vmul.f32 1.0, %v851
      %v853 = vrcp.pop %v796
      %v854 = vmul.f32 1.0, %v853
      %v855 = vrcp.pop %v797
      %v856 = vmul.f32 1.0, %v855
      %v857 = vrcp.pop %v798
      %v858 = vmul.f32 1.0, %v857
      %v859 = vrcp.pop %v799
      %v860 = vmul.f32 1.0, %v859
      %v861 = vrcp.pop %v800
      %v862 = vmul.f32 1.0, %v861
      %v863 = vrcp.pop %v801
      %v864 = vmul.f32 1.0, %v863
      %v865 = vrcp.pop %v802
      %v866 = vmul.f32 1.0, %v865
      %v867 = vmul.f32 %v643, %v804
      %v868 = vmul.f32 %v644, %v806
      %v869 = vmul.f32 %v645, %v808
      %v870 = vmul.f32 %v646, %v810
      %v871 = vmul.f32 %v647, %v812
      %v872 = vmul.f32 %v648, %v814
      %v873 = vmul.f32 %v649, %v816
      %v874 = vmul.f32 %v650, %v818
      %v875 = vmul.f32 %v651, %v820
      %v876 = vmul.f32 %v652, %v822
      %v877 = vmul.f32 %v653, %v824
      %v878 = vmul.f32 %v654, %v826
      %v879 = vmul.f32 %v655, %v828
      %v880 = vmul.f32 %v656, %v830
      %v881 = vmul.f32 %v657, %v832
      %v882 = vmul.f32 %v658, %v834
      %v883 = vmul.f32 %v659, %v836
      %v884 = vmul.f32 %v660, %v838
      %v885 = vmul.f32 %v661, %v840
      %v886 = vmul.f32 %v662, %v842
      %v887 = vmul.f32 %v663, %v844
      %v888 = vmul.f32 %v664, %v846
      %v889 = vmul.f32 %v665, %v848
      %v890 = vmul.f32 %v666, %v850
      %v891 = vmul.f32 %v667, %v852
      %v892 = vmul.f32 %v668, %v854
      %v893 = vmul.f32 %v669, %v856
      %v894 = vmul.f32 %v670, %v858
      %v895 = vmul.f32 %v671, %v860
      %v896 = vmul.f32 %v672, %v862
      %v897 = vmul.f32 %v673, %v864
      %v898 = vmul.f32 %v674, %v866
      %vm899 = vcmask 31744
      %900 = vst.msk [vmem:[%s234] sm:$0xff] %vm899, %v867
      %901 = vst.msk [vmem:[%s234 + $0x8] sm:$0xff] %vm899, %v868
      %902 = vst.msk [vmem:[%s234 + $0x10] sm:$0xff] %vm899, %v869
      %903 = vst.msk [vmem:[%s234 + $0x18] sm:$0xff] %vm899, %v870
      %904 = vst.msk [vmem:[%s234 + $0x20] sm:$0xff] %vm899, %v871
      %905 = vst.msk [vmem:[%s234 + $0x28] sm:$0xff] %vm899, %v872
      %906 = vst.msk [vmem:[%s234 + $0x30] sm:$0xff] %vm899, %v873
      %907 = vst.msk [vmem:[%s234 + $0x38] sm:$0xff] %vm899, %v874
      %908 = vst.msk [vmem:[%s234 + $0x40] sm:$0xff] %vm899, %v875
      %909 = vst.msk [vmem:[%s234 + $0x48] sm:$0xff] %vm899, %v876
      %910 = vst.msk [vmem:[%s234 + $0x50] sm:$0xff] %vm899, %v877
      %911 = vst.msk [vmem:[%s234 + $0x58] sm:$0xff] %vm899, %v878
      %912 = vst.msk [vmem:[%s234 + $0x60] sm:$0xff] %vm899, %v879
      %913 = vst.msk [vmem:[%s234 + $0x68] sm:$0xff] %vm899, %v880
      %914 = vst.msk [vmem:[%s234 + $0x70] sm:$0xff] %vm899, %v881
      %915 = vst.msk [vmem:[%s234 + $0x78] sm:$0xff] %vm899, %v882
      %916 = vst.msk [vmem:[%s234 + $0x80] sm:$0xff] %vm899, %v883
      %917 = vst.msk [vmem:[%s234 + $0x88] sm:$0xff] %vm899, %v884
      %918 = vst.msk [vmem:[%s234 + $0x90] sm:$0xff] %vm899, %v885
      %919 = vst.msk [vmem:[%s234 + $0x98] sm:$0xff] %vm899, %v886
      %920 = vst.msk [vmem:[%s234 + $0xa0] sm:$0xff] %vm899, %v887
      %921 = vst.msk [vmem:[%s234 + $0xa8] sm:$0xff] %vm899, %v888
      %922 = vst.msk [vmem:[%s234 + $0xb0] sm:$0xff] %vm899, %v889
      %923 = vst.msk [vmem:[%s234 + $0xb8] sm:$0xff] %vm899, %v890
      %924 = vst.msk [vmem:[%s234 + $0xc0] sm:$0xff] %vm899, %v891
      %925 = vst.msk [vmem:[%s234 + $0xc8] sm:$0xff] %vm899, %v892
      %926 = vst.msk [vmem:[%s234 + $0xd0] sm:$0xff] %vm899, %v893
      %927 = vst.msk [vmem:[%s234 + $0xd8] sm:$0xff] %vm899, %v894
      %928 = vst.msk [vmem:[%s234 + $0xe0] sm:$0xff] %vm899, %v895
      %929 = vst.msk [vmem:[%s234 + $0xe8] sm:$0xff] %vm899, %v896
      %930 = vst.msk [vmem:[%s234 + $0xf0] sm:$0xff] %vm899, %v897
      %931 = vst.msk [vmem:[%s234 + $0xf8] sm:$0xff] %vm899, %v898
      %964 = vrot.lane.b32.xlu0 %v867, 124
      %v965 = vpop.permute.xlu0 %964
      %966 = vrot.lane.b32.xlu0 %v868, 124
      %v967 = vpop.permute.xlu0 %966
      %968 = vrot.lane.b32.xlu0 %v869, 124
      %v969 = vpop.permute.xlu0 %968
      %970 = vrot.lane.b32.xlu0 %v870, 124
      %v971 = vpop.permute.xlu0 %970
      %972 = vrot.lane.b32.xlu0 %v871, 124
      %v973 = vpop.permute.xlu0 %972
      %974 = vrot.lane.b32.xlu0 %v872, 124
      %v975 = vpop.permute.xlu0 %974
      %976 = vrot.lane.b32.xlu0 %v873, 124
      %v977 = vpop.permute.xlu0 %976
      %978 = vrot.lane.b32.xlu0 %v874, 124
      %v979 = vpop.permute.xlu0 %978
      %980 = vrot.lane.b32.xlu0 %v875, 124
      %v981 = vpop.permute.xlu0 %980
      %982 = vrot.lane.b32.xlu0 %v876, 124
      %v983 = vpop.permute.xlu0 %982
      %984 = vrot.lane.b32.xlu0 %v877, 124
      %v985 = vpop.permute.xlu0 %984
      %986 = vrot.lane.b32.xlu0 %v878, 124
      %v987 = vpop.permute.xlu0 %986
      %988 = vrot.lane.b32.xlu0 %v879, 124
      %v989 = vpop.permute.xlu0 %988
      %990 = vrot.lane.b32.xlu0 %v880, 124
      %v991 = vpop.permute.xlu0 %990
      %992 = vrot.lane.b32.xlu0 %v881, 124
      %v993 = vpop.permute.xlu0 %992
      %994 = vrot.lane.b32.xlu0 %v882, 124
      %v995 = vpop.permute.xlu0 %994
      %996 = vrot.lane.b32.xlu0 %v883, 124
      %v997 = vpop.permute.xlu0 %996
      %998 = vrot.lane.b32.xlu0 %v884, 124
      %v999 = vpop.permute.xlu0 %998
      %1000 = vrot.lane.b32.xlu0 %v885, 124
      %v1001 = vpop.permute.xlu0 %1000
      %1002 = vrot.lane.b32.xlu0 %v886, 124
      %v1003 = vpop.permute.xlu0 %1002
      %1004 = vrot.lane.b32.xlu0 %v887, 124
      %v1005 = vpop.permute.xlu0 %1004
      %1006 = vrot.lane.b32.xlu0 %v888, 124
      %v1007 = vpop.permute.xlu0 %1006
      %1008 = vrot.lane.b32.xlu0 %v889, 124
      %v1009 = vpop.permute.xlu0 %1008
      %1010 = vrot.lane.b32.xlu0 %v890, 124
      %v1011 = vpop.permute.xlu0 %1010
      %1012 = vrot.lane.b32.xlu0 %v891, 124
      %v1013 = vpop.permute.xlu0 %1012
      %1014 = vrot.lane.b32.xlu0 %v892, 124
      %v1015 = vpop.permute.xlu0 %1014
      %1016 = vrot.lane.b32.xlu0 %v893, 124
      %v1017 = vpop.permute.xlu0 %1016
      %1018 = vrot.lane.b32.xlu0 %v894, 124
      %v1019 = vpop.permute.xlu0 %1018
      %1020 = vrot.lane.b32.xlu0 %v895, 124
      %v1021 = vpop.permute.xlu0 %1020
      %1022 = vrot.lane.b32.xlu0 %v896, 124
      %v1023 = vpop.permute.xlu0 %1022
      %1024 = vrot.lane.b32.xlu0 %v897, 124
      %v1025 = vpop.permute.xlu0 %1024
      %1026 = vrot.lane.b32.xlu0 %v898, 124
      %v1027 = vpop.permute.xlu0 %1026
      %1060 = vst.msk [vmem:[%s240] sm:$0xff] %vm899, %v965
      %1061 = vst.msk [vmem:[%s240 + $0x8] sm:$0xff] %vm899, %v967
      %1062 = vst.msk [vmem:[%s240 + $0x10] sm:$0xff] %vm899, %v969
      %1063 = vst.msk [vmem:[%s240 + $0x18] sm:$0xff] %vm899, %v971
      %1064 = vst.msk [vmem:[%s240 + $0x20] sm:$0xff] %vm899, %v973
      %1065 = vst.msk [vmem:[%s240 + $0x28] sm:$0xff] %vm899, %v975
      %1066 = vst.msk [vmem:[%s240 + $0x30] sm:$0xff] %vm899, %v977
      %1067 = vst.msk [vmem:[%s240 + $0x38] sm:$0xff] %vm899, %v979
      %1068 = vst.msk [vmem:[%s240 + $0x40] sm:$0xff] %vm899, %v981
      %1069 = vst.msk [vmem:[%s240 + $0x48] sm:$0xff] %vm899, %v983
      %1070 = vst.msk [vmem:[%s240 + $0x50] sm:$0xff] %vm899, %v985
      %1071 = vst.msk [vmem:[%s240 + $0x58] sm:$0xff] %vm899, %v987
      %1072 = vst.msk [vmem:[%s240 + $0x60] sm:$0xff] %vm899, %v989
      %1073 = vst.msk [vmem:[%s240 + $0x68] sm:$0xff] %vm899, %v991
      %1074 = vst.msk [vmem:[%s240 + $0x70] sm:$0xff] %vm899, %v993
      %1075 = vst.msk [vmem:[%s240 + $0x78] sm:$0xff] %vm899, %v995
      %1076 = vst.msk [vmem:[%s240 + $0x80] sm:$0xff] %vm899, %v997
      %1077 = vst.msk [vmem:[%s240 + $0x88] sm:$0xff] %vm899, %v999
      %1078 = vst.msk [vmem:[%s240 + $0x90] sm:$0xff] %vm899, %v1001
      %1079 = vst.msk [vmem:[%s240 + $0x98] sm:$0xff] %vm899, %v1003
      %1080 = vst.msk [vmem:[%s240 + $0xa0] sm:$0xff] %vm899, %v1005
      %1081 = vst.msk [vmem:[%s240 + $0xa8] sm:$0xff] %vm899, %v1007
      %1082 = vst.msk [vmem:[%s240 + $0xb0] sm:$0xff] %vm899, %v1009
      %1083 = vst.msk [vmem:[%s240 + $0xb8] sm:$0xff] %vm899, %v1011
      %1084 = vst.msk [vmem:[%s240 + $0xc0] sm:$0xff] %vm899, %v1013
      %1085 = vst.msk [vmem:[%s240 + $0xc8] sm:$0xff] %vm899, %v1015
      %1086 = vst.msk [vmem:[%s240 + $0xd0] sm:$0xff] %vm899, %v1017
      %1087 = vst.msk [vmem:[%s240 + $0xd8] sm:$0xff] %vm899, %v1019
      %1088 = vst.msk [vmem:[%s240 + $0xe0] sm:$0xff] %vm899, %v1021
      %1089 = vst.msk [vmem:[%s240 + $0xe8] sm:$0xff] %vm899, %v1023
      %1090 = vst.msk [vmem:[%s240 + $0xf0] sm:$0xff] %vm899, %v1025
      %1091 = vst.msk [vmem:[%s240 + $0xf8] sm:$0xff] %vm899, %v1027
      %s1092 = smul.u32 32, %s17
      %p1093 = scmp.lt.s32.totalorder %s1092, 63
      %s1094 = scalar_select %p1093, %s1092, 63
      %s1095 = smul.addr %s1094, 8
      %s1096 = scalar_lea.vmem %s4, %s1095
      %s1097 = smul.u32 32, %s17
      %p1098 = scmp.lt.s32.totalorder %s1097, 63
      %s1099 = scalar_select %p1098, %s1097, 63
      %s1100 = smul.addr %s1099, 8
      %s1101 = scalar_lea.vmem %s5, %s1100
      // Predicated region
      $region37: #{tpu_custom_call.1} parent=35 // pred_check
        %p1102 = pneg %p124
      $region38: #{tpu_custom_call.1} parent=35 // pred_check_branch
        %1104 = sbr.rel (%p1102) target = $region40
      $region39: #{tpu_custom_call.1} parent=35 // pred_region
        %s1105 = smul.u32 32, %s17
      $region40: #{tpu_custom_call.1} parent=35 // pred_fallthru
        _
      // Predicated region
      $region41: #{tpu_custom_call.1} parent=35 // pred_check
        %p1106 = pneg %p150
      $region42: #{tpu_custom_call.1} parent=35 // pred_check_branch
        %1108 = sbr.rel (%p1106) target = $region44
      $region43: #{tpu_custom_call.1} parent=35 // pred_region
        %s1109 = smul.u32 32, %s17
      $region44: #{tpu_custom_call.1} parent=35 // pred_fallthru
        _
    $region36: #{tpu_custom_call.1} parent=5 // pred_fallthru
      _
    %p1110 = scmp.le.s32.totalorder 2, %s12
    // Predicated region
    $region45: #{tpu_custom_call.1} parent=5 // pred_check
      %p1111 = pneg %p1110
    $region46: #{tpu_custom_call.1} parent=5 // pred_check_branch
      %1113 = sbr.rel (%p1111) target = $region48
    $region47: #{tpu_custom_call.1} parent=5 // pred_region
      %s1114 = ssub.s32 %s12, 2
      // Predicated region
      $region49: #{tpu_custom_call.1} parent=47 // pred_check
        %p1115 = pneg %p130
      $region50: #{tpu_custom_call.1} parent=47 // pred_check_branch
        %1117 = sbr.rel (%p1115) target = $region52
      $region51: #{tpu_custom_call.1} parent=47 // pred_region
        %s1118 = smul.u32 32, %s18
        %p1119 = scmp.lt.s32.totalorder %s1118, 63
        %s1120 = scalar_select %p1119, %s1118, 63
        %s1121 = smul.addr %s1120, 8
        %s1122 = scalar_lea.vmem %s4, %s1121
      $region52: #{tpu_custom_call.1} parent=47 // pred_fallthru
        _
      // Predicated region
      $region53: #{tpu_custom_call.1} parent=47 // pred_check
        %p1123 = pneg %p156
      $region54: #{tpu_custom_call.1} parent=47 // pred_check_branch
        %1125 = sbr.rel (%p1123) target = $region56
      $region55: #{tpu_custom_call.1} parent=47 // pred_region
        %s1126 = smul.u32 32, %s18
        %p1127 = scmp.lt.s32.totalorder %s1126, 63
        %s1128 = scalar_select %p1127, %s1126, 63
        %s1129 = smul.addr %s1128, 8
        %s1130 = scalar_lea.vmem %s5, %s1129
      $region56: #{tpu_custom_call.1} parent=47 // pred_fallthru
        _
    $region48: #{tpu_custom_call.1} parent=5 // pred_fallthru
      _
  $region6: #{tpu_custom_call.1} parent=0 // loop_footer
    %s16 = sadd.s32 1, %s12
  $region7: #{tpu_custom_call.1} parent=0 // loop_footer_branch
    %11 = sbr.rel target = $region3
  $region8: #{tpu_custom_call.1} parent=0 // loop_exit
    _

</llo_original>
